<compile_context>
chip_gen: v7x
topology: tpu7x:2x2x1
jax: 0.10.0
libtpu: 0.0.40
codegen_flags: <defaults>
</compile_context>

<pallas_src>
import functools

import jax
import jax.numpy as jnp
import numpy as np
from jax.experimental import pallas as pl
from jax.experimental.pallas import tpu as pltpu

# --- fixed hyper-parameters (STL.__init__ hard-codes these regardless of args) ---
TOKEN_EMB = 384                       # token_embedding_size
NUM_HEADS = 8
HEAD_DIM = TOKEN_EMB // NUM_HEADS     # 48
TOKEN_NUM = 10                        # number of style tokens
QUERY_DIM = 128                       # reference_dim (forced to 128 inside STL)
KEY_DIM = HEAD_DIM                    # 48: 1/sqrt(d) scale in attention
SLOT = 16                             # per-head score slot (10 tokens padded -> 16 lanes)
LANES = NUM_HEADS * SLOT              # 128: lane-dense score width


def gst_kernel(x_ref, wq_ref, kp_ref, seg_ref, vp_ref, out_ref):
    """One batch tile: q projection + all-head attention as 4 full-width matmuls."""
    mm_dtype = wq_ref.dtype                                   # f32 or bf16 operands

    # Query projection: [T, 128] x [128, 384] -> [T, 384] (f32 accumulate).
    q = jnp.dot(x_ref[...], wq_ref[...], preferred_element_type=jnp.float32)

    # All-head scores in one matmul; 1/sqrt(KEY_DIM) is folded into K'.
    # Lane layout: head h occupies lanes [16h, 16h+16), tokens 0..9 real, 10..15 pad(=0).
    s = jnp.dot(q.astype(mm_dtype), kp_ref[...],
                preferred_element_type=jnp.float32)           # [T, 128]

    # Softmax per 16-lane head segment. A global row max is a valid common shift
    # (softmax is shift-invariant within each segment); pad lanes contribute
    # nothing because both S and V' have zero rows there.
    m = jnp.max(s, axis=-1, keepdims=True)                    # [T, 1]
    p = jnp.exp(s - m)                                        # [T, 128], f32

    # Per-segment denominator, broadcast to every lane of its segment via matmul.
    denom = jnp.dot(p.astype(mm_dtype), seg_ref[...],
                    preferred_element_type=jnp.float32)       # [T, 128]
    p_norm = p * pl.reciprocal(denom, approx=True)            # EUP vrcp

    # Weighted values: output is already head-concatenated (lane-dense, 384 = 3*128).
    out_ref[...] = jnp.dot(p_norm.astype(mm_dtype), vp_ref[...],
                           preferred_element_type=jnp.float32).astype(out_ref.dtype)


def _round_up(x, m):
    return (x + m - 1) // m * m


@functools.partial(jax.jit, static_argnames=("tile_n", "use_bf16"))
def gst_forward(inputs, embed, w_query, w_key, w_value, *, tile_n=512, use_bf16=False):
    """inputs: [N, 128]; weights in PyTorch layout [out_features, in_features].

    tile_n: batch tile (rows per grid step).  512 is a portable default; on v6e
    it can be raised to ~2048 (with vmem_limit_bytes), keep <= ~1024 on v7x.
    use_bf16: bf16 MXU operands (f32 accumulate / f32 softmax) for large N.
    """
    N = inputs.shape[0]
    f32 = jnp.float32
    mm_dtype = jnp.bfloat16 if use_bf16 else f32

    # ---- batch-independent key/value path, computed once in the wrapper ----
    keys_in = jnp.tanh(jnp.asarray(embed, f32))               # [10, 48]
    k = keys_in @ jnp.asarray(w_key, f32).T                   # [10, 384]
    v = keys_in @ jnp.asarray(w_value, f32).T                 # [10, 384]

    eye_h = jnp.eye(NUM_HEADS, dtype=f32)

    # K' [384, 128]: K'[48h+d, 16h+t] = k[t, 48h+d] / sqrt(KEY_DIM); zero elsewhere.
    k3 = k.reshape(TOKEN_NUM, NUM_HEADS, HEAD_DIM)            # [T, H, D]
    kp = jnp.einsum('thd,hg->hdgt', k3, eye_h)                # [H, D, H, T]
    kp = jnp.pad(kp, ((0, 0), (0, 0), (0, 0), (0, SLOT - TOKEN_NUM)))
    kp = kp.reshape(TOKEN_EMB, LANES) * (1.0 / np.sqrt(KEY_DIM))

    # V' [128, 384]: V'[16h+t, 48h+d] = v[t, 48h+d]; zero elsewhere (pad rows zero).
    v3 = v.reshape(TOKEN_NUM, NUM_HEADS, HEAD_DIM)            # [T, H, D]
    vp = jnp.einsum('thd,hg->htgd', v3, eye_h)                # [H, T, H, D]
    vp = jnp.pad(vp, ((0, 0), (0, SLOT - TOKEN_NUM), (0, 0), (0, 0)))
    vp = vp.reshape(LANES, TOKEN_EMB)

    # Segment-sum matrix: S[i, j] = 1 iff i and j are in the same 16-lane slot
    # and i is a real token lane (i % 16 < 10).  p @ S = per-segment softmax sum
    # broadcast to every lane of that segment; pad lanes of p never contribute.
    lane = np.arange(LANES)
    seg_np = ((lane[:, None] // SLOT) == (lane[None, :] // SLOT)) & \
             ((lane[:, None] % SLOT) < TOKEN_NUM)
    seg = jnp.asarray(seg_np, f32)

    wq_t = jnp.asarray(w_query, f32).T                        # [128, 384]

    # Matmul operand dtype (0/1 and weight casts are exact or benign in bf16).
    x = jnp.asarray(inputs, mm_dtype)
    wq_t = wq_t.astype(mm_dtype)
    kp = kp.astype(mm_dtype)
    vp = vp.astype(mm_dtype)
    seg = seg.astype(mm_dtype)

    # ---- batch tiling (zero-pad ragged remainder, slice off after) ----
    tile = min(tile_n, max(16, _round_up(N, 16)))
    n_pad = _round_up(N, tile)
    if n_pad != N:
        x = jnp.pad(x, ((0, n_pad - N), (0, 0)))
    grid = (n_pad // tile,)

    out = pl.pallas_call(
        gst_kernel,
        out_shape=jax.ShapeDtypeStruct((n_pad, TOKEN_EMB), jnp.float32),
        grid=grid,
        in_specs=[
            pl.BlockSpec((tile, QUERY_DIM), lambda i: (i, 0)),       # x tile
            pl.BlockSpec((QUERY_DIM, TOKEN_EMB), lambda i: (0, 0)),  # Wq^T (resident)
            pl.BlockSpec((TOKEN_EMB, LANES), lambda i: (0, 0)),      # K'   (resident)
            pl.BlockSpec((LANES, LANES), lambda i: (0, 0)),          # S    (resident)
            pl.BlockSpec((LANES, TOKEN_EMB), lambda i: (0, 0)),      # V'   (resident)
        ],
        out_specs=pl.BlockSpec((tile, TOKEN_EMB), lambda i: (i, 0)),
        compiler_params=pltpu.CompilerParams(
            dimension_semantics=("parallel",)),
    )(x, wq_t, kp, seg, vp)

    return out[:N]


def gst_reference(inputs, embed, w_query, w_key, w_value):
    """Pure-JAX reference replicating the PyTorch semantics exactly."""
    N = inputs.shape[0]
    query = inputs[:, None, :]                                   # [N, 1, 128]
    keys = jnp.broadcast_to(jnp.tanh(embed)[None], (N, TOKEN_NUM, HEAD_DIM))
    q = query @ w_query.T                                        # [N, 1, 384]
    k = keys @ w_key.T                                           # [N, 10, 384]
    v = keys @ w_value.T                                         # [N, 10, 384]
    qh = jnp.stack(jnp.split(q, NUM_HEADS, axis=2), axis=0)      # [H, N, 1, 48]
    kh = jnp.stack(jnp.split(k, NUM_HEADS, axis=2), axis=0)
    vh = jnp.stack(jnp.split(v, NUM_HEADS, axis=2), axis=0)
    scores = jnp.einsum('hnqd,hnkd->hnqk', qh, kh) / (KEY_DIM ** 0.5)
    scores = jax.nn.softmax(scores, axis=3)
    out = jnp.einsum('hnqk,hnkd->hnqd', scores, vh)              # [H, N, 1, 48]
    out = jnp.concatenate(jnp.split(out, NUM_HEADS, axis=0), axis=3)[0]
    return out[:, 0, :]                                          # [N, 384]


if __name__ == "__main__":
    key = jax.random.PRNGKey(0)
    k_in, k_emb, k_q, k_k, k_v = jax.random.split(key, 5)

    N = 4  # small batch
    inputs = jax.random.normal(k_in, (N, QUERY_DIM), jnp.float32)

    # embed ~ Normal(0, 0.5)   (init.normal_(self.embed, mean=0, std=0.5))
    embed = 0.5 * jax.random.normal(k_emb, (TOKEN_NUM, HEAD_DIM), jnp.float32)

    # Linear weights, PyTorch layout [out_features, in_features], uniform(+-1/sqrt(fan_in))
    def linear_w(k, out_f, in_f):
        bound = 1.0 / np.sqrt(in_f)
        return jax.random.uniform(k, (out_f, in_f), jnp.float32, -bound, bound)

    w_query = linear_w(k_q, TOKEN_EMB, QUERY_DIM)   # [384, 128]
    w_key = linear_w(k_k, TOKEN_EMB, HEAD_DIM)      # [384, 48]
    w_value = linear_w(k_v, TOKEN_EMB, HEAD_DIM)    # [384, 48]

    ref = gst_reference(inputs, embed, w_query, w_key, w_value)

    # f32-operand path (approx EUP reciprocal => tolerance slightly looser than 1e-5).
    out = jax.block_until_ready(gst_forward(inputs, embed, w_query, w_key, w_value))
    assert out.shape == (N, TOKEN_EMB)
    np.testing.assert_allclose(np.asarray(out), np.asarray(ref), rtol=2e-3, atol=2e-3)

    # Multi-tile grid with a ragged (zero-padded) last batch tile.
    N2 = 300
    inputs2 = jax.random.normal(jax.random.PRNGKey(1), (N2, QUERY_DIM), jnp.float32)
    ref2 = gst_reference(inputs2, embed, w_query, w_key, w_value)
    out2 = jax.block_until_ready(
        gst_forward(inputs2, embed, w_query, w_key, w_value, tile_n=128))
    np.testing.assert_allclose(np.asarray(out2), np.asarray(ref2), rtol=2e-3, atol=2e-3)

    # bf16 MXU operands (f32 accumulate + f32 softmax) — looser tolerance.
    out_bf16 = jax.block_until_ready(
        gst_forward(inputs, embed, w_query, w_key, w_value, use_bf16=True))
    np.testing.assert_allclose(np.asarray(out_bf16), np.asarray(ref), rtol=5e-2, atol=5e-2)

    print("KERNEL_OK")
</pallas_src>

<mosaic_0001>
module attributes {stable_mosaic.version = 11 : i64} {
  func.func @gst_kernel(%arg0: i32, %arg1: memref<16x128xf32, #tpu.memory_space<vmem>>, %arg2: memref<128x384xf32, #tpu.memory_space<vmem>>, %arg3: memref<384x128xf32, #tpu.memory_space<vmem>>, %arg4: memref<128x128xf32, #tpu.memory_space<vmem>>, %arg5: memref<128x384xf32, #tpu.memory_space<vmem>>, %arg6: memref<16x384xf32, #tpu.memory_space<vmem>>) attributes {dimension_semantics = [#tpu.dimension_semantics<parallel>], iteration_bounds = array<i64: 1>, scalar_prefetch = 0 : i64, scratch_operands = 0 : i64, tpu.core_type = #tpu.core_type<tc>, window_params = [{transform_indices = @transform_0, window_bounds = array<i64: 16, 128>}, {pipeline_mode = #tpu.pipeline_mode<synchronous>, transform_indices = @transform_1, window_bounds = array<i64: 128, 384>}, {pipeline_mode = #tpu.pipeline_mode<synchronous>, transform_indices = @transform_2, window_bounds = array<i64: 384, 128>}, {pipeline_mode = #tpu.pipeline_mode<synchronous>, transform_indices = @transform_3, window_bounds = array<i64: 128, 128>}, {pipeline_mode = #tpu.pipeline_mode<synchronous>, transform_indices = @transform_4, window_bounds = array<i64: 128, 384>}, {transform_indices = @transform_5, window_bounds = array<i64: 16, 384>}]} {
    %c0 = arith.constant 0 : index
    %c0_0 = arith.constant 0 : index
    %0 = vector.load %arg1[%c0, %c0_0] : memref<16x128xf32, #tpu.memory_space<vmem>>, vector<16x128xf32>
    %c0_1 = arith.constant 0 : index
    %c0_2 = arith.constant 0 : index
    %1 = vector.load %arg2[%c0_1, %c0_2] : memref<128x384xf32, #tpu.memory_space<vmem>>, vector<128x384xf32>
    %cst = arith.constant dense<0.000000e+00> : vector<16x384xf32>
    %2 = tpu.matmul %0, %1, %cst {dimension_numbers = #tpu.dot_dimension_numbers<[1], [0], [0], [1], [0, 0, 1, 1], [], []>} : vector<16x128xf32>, vector<128x384xf32>, vector<16x384xf32> -> vector<16x384xf32>
    %c0_3 = arith.constant 0 : index
    %c0_4 = arith.constant 0 : index
    %3 = vector.load %arg3[%c0_3, %c0_4] : memref<384x128xf32, #tpu.memory_space<vmem>>, vector<384x128xf32>
    %cst_5 = arith.constant dense<0.000000e+00> : vector<16x128xf32>
    %4 = tpu.matmul %2, %3, %cst_5 {dimension_numbers = #tpu.dot_dimension_numbers<[1], [0], [0], [1], [0, 0, 1, 1], [], []>} : vector<16x384xf32>, vector<384x128xf32>, vector<16x128xf32> -> vector<16x128xf32>
    %cst_6 = arith.constant dense<0xFF800000> : vector<16xf32>
    %5 = vector.multi_reduction <maximumf>, %4, %cst_6 [1] : vector<16x128xf32> to vector<16xf32>
    %6 = vector.shape_cast %5 : vector<16xf32> to vector<16x1xf32>
    %7 = vector.broadcast %6 : vector<16x1xf32> to vector<16x128xf32>
    %8 = arith.subf %4, %7 : vector<16x128xf32>
    %9 = math.exp %8 : vector<16x128xf32>
    %c0_7 = arith.constant 0 : index
    %c0_8 = arith.constant 0 : index
    %10 = vector.load %arg4[%c0_7, %c0_8] : memref<128x128xf32, #tpu.memory_space<vmem>>, vector<128x128xf32>
    %cst_9 = arith.constant dense<0.000000e+00> : vector<16x128xf32>
    %11 = tpu.matmul %9, %10, %cst_9 {dimension_numbers = #tpu.dot_dimension_numbers<[1], [0], [0], [1], [0, 0, 1, 1], [], []>} : vector<16x128xf32>, vector<128x128xf32>, vector<16x128xf32> -> vector<16x128xf32>
    %12 = tpu.reciprocal %11 {approx = true} : vector<16x128xf32> -> vector<16x128xf32>
    %13 = arith.mulf %9, %12 : vector<16x128xf32>
    %c0_10 = arith.constant 0 : index
    %c0_11 = arith.constant 0 : index
    %14 = vector.load %arg5[%c0_10, %c0_11] : memref<128x384xf32, #tpu.memory_space<vmem>>, vector<128x384xf32>
    %cst_12 = arith.constant dense<0.000000e+00> : vector<16x384xf32>
    %15 = tpu.matmul %13, %14, %cst_12 {dimension_numbers = #tpu.dot_dimension_numbers<[1], [0], [0], [1], [0, 0, 1, 1], [], []>} : vector<16x128xf32>, vector<128x384xf32>, vector<16x384xf32> -> vector<16x384xf32>
    %c0_13 = arith.constant 0 : index
    %c0_14 = arith.constant 0 : index
    %16 = vector.load %arg6[%c0_13, %c0_14] : memref<16x384xf32, #tpu.memory_space<vmem>>, vector<16x384xf32>
    tpu.vector_store %arg6[%c0_13, %c0_14], %15 {strides = array<i32>} : memref<16x384xf32, #tpu.memory_space<vmem>>, vector<16x384xf32>,
    return
  }
  func.func @transform_0(%arg0: i32) -> (i32, i32) {
    %c0_i32 = arith.constant 0 : i32
    %c0_i32_0 = arith.constant 0 : i32
    return %arg0, %c0_i32 : i32, i32
  }
  func.func @transform_1(%arg0: i32) -> (i32, i32) {
    %c0_i32 = arith.constant 0 : i32
    %c0_i32_0 = arith.constant 0 : i32
    %c0_i32_1 = arith.constant 0 : i32
    return %c0_i32, %c0_i32_0 : i32, i32
  }
  func.func @transform_2(%arg0: i32) -> (i32, i32) {
    %c0_i32 = arith.constant 0 : i32
    %c0_i32_0 = arith.constant 0 : i32
    %c0_i32_1 = arith.constant 0 : i32
    return %c0_i32, %c0_i32_0 : i32, i32
  }
  func.func @transform_3(%arg0: i32) -> (i32, i32) {
    %c0_i32 = arith.constant 0 : i32
    %c0_i32_0 = arith.constant 0 : i32
    %c0_i32_1 = arith.constant 0 : i32
    return %c0_i32, %c0_i32_0 : i32, i32
  }
  func.func @transform_4(%arg0: i32) -> (i32, i32) {
    %c0_i32 = arith.constant 0 : i32
    %c0_i32_0 = arith.constant 0 : i32
    %c0_i32_1 = arith.constant 0 : i32
    return %c0_i32, %c0_i32_0 : i32, i32
  }
  func.func @transform_5(%arg0: i32) -> (i32, i32) {
    %c0_i32 = arith.constant 0 : i32
    %c0_i32_0 = arith.constant 0 : i32
    return %arg0, %c0_i32 : i32, i32
  }
}

</mosaic_0001>

<llo_original>
// kernel: gst_forward.1
$region0: #{gst_forward.1}
  #allocation0 [shape = 'u32[]', space=smem, size = 0x4, offset = 0x4, fixed_abs, tag = 'smem constant byte address 0x4 - core index']
  #allocation1 [shape = 'u32[144,128]{1,0:T(1,128)}', space=vmem, size = 0x12000, scoped, tag = 'internal scratch']
  %s0 = inlined_call_operand.vmem [shape: f32[16,128], index: 0, kind: input, shape index: {}]
  %s1 = inlined_call_operand.vmem [shape: f32[128,384], index: 1, kind: input, shape index: {}]
  %s2 = inlined_call_operand.vmem [shape: f32[384,128], index: 2, kind: input, shape index: {}]
  %s3 = inlined_call_operand.vmem [shape: f32[128,128], index: 3, kind: input, shape index: {}]
  %s4 = inlined_call_operand.vmem [shape: f32[128,384], index: 4, kind: input, shape index: {}]
  %s5 = inlined_call_operand.vmem [shape: f32[16,384], index: 5, kind: output, shape index: {}]
  %s6 = sld [smem:[#allocation0]]
  $region30: #{gst_forward.1} parent=0
    _
  %s8 = ssub.s32 1, %s6
  %s9 = scalar_select 0, %s8, %s6
  // Predicated region
  $region2: #{gst_forward.1} parent=0 // pred_check
    _
  $region3: #{gst_forward.1} parent=0 // pred_check_branch
    %11 = sbr.rel (0) target = $region5
  $region4: #{gst_forward.1} parent=0 // pred_region
    _
  $region5: #{gst_forward.1} parent=0 // pred_fallthru
    _
  // Predicated region
  $region6: #{gst_forward.1} parent=0 // pred_check
    _
  $region7: #{gst_forward.1} parent=0 // pred_check_branch
    %13 = sbr.rel (0) target = $region9
  $region8: #{gst_forward.1} parent=0 // pred_region
    _
  $region9: #{gst_forward.1} parent=0 // pred_fallthru
    _
  // Predicated region
  $region10: #{gst_forward.1} parent=0 // pred_check
    _
  $region11: #{gst_forward.1} parent=0 // pred_check_branch
    %15 = sbr.rel (0) target = $region13
  $region12: #{gst_forward.1} parent=0 // pred_region
    _
  $region13: #{gst_forward.1} parent=0 // pred_fallthru
    _
  // Predicated region
  $region14: #{gst_forward.1} parent=0 // pred_check
    _
  $region15: #{gst_forward.1} parent=0 // pred_check_branch
    %17 = sbr.rel (0) target = $region17
  $region16: #{gst_forward.1} parent=0 // pred_region
    _
  $region17: #{gst_forward.1} parent=0 // pred_fallthru
    _
  // Predicated region
  $region18: #{gst_forward.1} parent=0 // pred_check
    _
  $region19: #{gst_forward.1} parent=0 // pred_check_branch
    %19 = sbr.rel (0) target = $region21
  $region20: #{gst_forward.1} parent=0 // pred_region
    _
  $region21: #{gst_forward.1} parent=0 // pred_fallthru
    _
  %v20 = vld [vmem:[%s0] sm:$0xff]
  %v21 = vld [vmem:[%s0 + $0x8] sm:$0xff]
  %v22 = vld [vmem:[%s1] sm:$0xff]
  %v23 = vld [vmem:[%s1 + $0x8] sm:$0xff]
  %v24 = vld [vmem:[%s1 + $0x10] sm:$0xff]
  %v25 = vld [vmem:[%s1 + $0x18] sm:$0xff]
  %v26 = vld [vmem:[%s1 + $0x20] sm:$0xff]
  %v27 = vld [vmem:[%s1 + $0x28] sm:$0xff]
  %v28 = vld [vmem:[%s1 + $0x30] sm:$0xff]
  %v29 = vld [vmem:[%s1 + $0x38] sm:$0xff]
  %v30 = vld [vmem:[%s1 + $0x40] sm:$0xff]
  %v31 = vld [vmem:[%s1 + $0x48] sm:$0xff]
  %v32 = vld [vmem:[%s1 + $0x50] sm:$0xff]
  %v33 = vld [vmem:[%s1 + $0x58] sm:$0xff]
  %v34 = vld [vmem:[%s1 + $0x60] sm:$0xff]
  %v35 = vld [vmem:[%s1 + $0x68] sm:$0xff]
  %v36 = vld [vmem:[%s1 + $0x70] sm:$0xff]
  %v37 = vld [vmem:[%s1 + $0x78] sm:$0xff]
  %v38 = vld [vmem:[%s1 + $0x80] sm:$0xff]
  %v39 = vld [vmem:[%s1 + $0x88] sm:$0xff]
  %v40 = vld [vmem:[%s1 + $0x90] sm:$0xff]
  %v41 = vld [vmem:[%s1 + $0x98] sm:$0xff]
  %v42 = vld [vmem:[%s1 + $0xa0] sm:$0xff]
  %v43 = vld [vmem:[%s1 + $0xa8] sm:$0xff]
  %v44 = vld [vmem:[%s1 + $0xb0] sm:$0xff]
  %v45 = vld [vmem:[%s1 + $0xb8] sm:$0xff]
  %v46 = vld [vmem:[%s1 + $0xc0] sm:$0xff]
  %v47 = vld [vmem:[%s1 + $0xc8] sm:$0xff]
  %v48 = vld [vmem:[%s1 + $0xd0] sm:$0xff]
  %v49 = vld [vmem:[%s1 + $0xd8] sm:$0xff]
  %v50 = vld [vmem:[%s1 + $0xe0] sm:$0xff]
  %v51 = vld [vmem:[%s1 + $0xe8] sm:$0xff]
  %v52 = vld [vmem:[%s1 + $0xf0] sm:$0xff]
  %v53 = vld [vmem:[%s1 + $0xf8] sm:$0xff]
  %v54 = vld [vmem:[%s1 + $0x100] sm:$0xff]
  %v55 = vld [vmem:[%s1 + $0x108] sm:$0xff]
  %v56 = vld [vmem:[%s1 + $0x110] sm:$0xff]
  %v57 = vld [vmem:[%s1 + $0x118] sm:$0xff]
  %v58 = vld [vmem:[%s1 + $0x120] sm:$0xff]
  %v59 = vld [vmem:[%s1 + $0x128] sm:$0xff]
  %v60 = vld [vmem:[%s1 + $0x130] sm:$0xff]
  %v61 = vld [vmem:[%s1 + $0x138] sm:$0xff]
  %v62 = vld [vmem:[%s1 + $0x140] sm:$0xff]
  %v63 = vld [vmem:[%s1 + $0x148] sm:$0xff]
  %v64 = vld [vmem:[%s1 + $0x150] sm:$0xff]
  %v65 = vld [vmem:[%s1 + $0x158] sm:$0xff]
  %v66 = vld [vmem:[%s1 + $0x160] sm:$0xff]
  %v67 = vld [vmem:[%s1 + $0x168] sm:$0xff]
  %v68 = vld [vmem:[%s1 + $0x170] sm:$0xff]
  %v69 = vld [vmem:[%s1 + $0x178] sm:$0xff]
  %70 = vmatprep.subr.mxu0 %v23
  %71 = vmatpush1.msra.mxu0 %v22
  %72 = vmatprep.subr.mxu0 %v26
  %73 = vmatpush1.msra.mxu0 %v25
  %74 = vmatprep.subr.mxu0 %v29
  %75 = vmatpush1.msra.mxu0 %v28
  %76 = vmatprep.subr.mxu0 %v32
  %77 = vmatpush1.msra.mxu0 %v31
  %78 = vmatprep.subr.mxu0 %v35
  %79 = vmatpush1.msra.mxu0 %v34
  %80 = vmatprep.subr.mxu0 %v38
  %81 = vmatpush1.msra.mxu0 %v37
  %82 = vmatprep.subr.mxu0 %v41
  %83 = vmatpush1.msra.mxu0 %v40
  %84 = vmatprep.subr.mxu0 %v44
  %85 = vmatpush1.msra.mxu0 %v43
  %86 = vmatprep.subr.mxu0 %v47
  %87 = vmatpush1.msra.mxu0 %v46
  %88 = vmatprep.subr.mxu0 %v50
  %89 = vmatpush1.msra.mxu0 %v49
  %90 = vmatprep.subr.mxu0 %v53
  %91 = vmatpush1.msra.mxu0 %v52
  %92 = vmatprep.subr.mxu0 %v56
  %93 = vmatpush1.msra.mxu0 %v55
  %94 = vmatprep.subr.mxu0 %v59
  %95 = vmatpush1.msra.mxu0 %v58
  %96 = vmatprep.subr.mxu0 %v62
  %97 = vmatpush1.msra.mxu0 %v61
  %98 = vmatprep.subr.mxu0 %v65
  %99 = vmatpush1.msra.mxu0 %v64
  %100 = vmatprep.subr.mxu0 %v68
  %101 = vmatpush1.msra.mxu0 %v67
  %102 = vmatprep.subr.mxu0 0.0
  %103 = vmatpush1.msra.mxu0 0.0
  %104 = vmatprep.subr.mxu0 0.0
  %105 = vmatpush1.msra.mxu0 0.0
  %106 = vmatprep.subr.mxu0 0.0
  %107 = vmatpush1.msra.mxu0 0.0
  %108 = vmatprep.subr.mxu0 0.0
  %109 = vmatpush1.msra.mxu0 0.0
  %110 = vmatprep.subr.mxu0 0.0
  %111 = vmatpush1.msra.mxu0 0.0
  %112 = vmatprep.subr.mxu0 0.0
  %113 = vmatpush1.msra.mxu0 0.0
  %114 = vmatprep.subr.mxu0 0.0
  %115 = vmatpush1.msra.mxu0 0.0
  %116 = vmatprep.subr.mxu0 0.0
  %117 = vmatpush1.msra.mxu0 0.0
  %118 = vmatprep.subr.mxu0 0.0
  %119 = vmatpush1.msra.mxu0 0.0
  %120 = vmatprep.subr.mxu0 0.0
  %121 = vmatpush1.msra.mxu0 0.0
  %122 = vmatprep.subr.mxu0 0.0
  %123 = vmatpush1.msra.mxu0 0.0
  %124 = vmatprep.subr.mxu0 0.0
  %125 = vmatpush1.msra.mxu0 0.0
  %126 = vmatprep.subr.mxu0 0.0
  %127 = vmatpush1.msra.mxu0 0.0
  %128 = vmatprep.subr.mxu0 0.0
  %129 = vmatpush1.msra.mxu0 0.0
  %130 = vmatprep.subr.mxu0 0.0
  %131 = vmatpush1.msra.mxu0 0.0
  %132 = vmatprep.subr.mxu0 0.0
  %133 = vmatpush1.msra.mxu0 0.0
  %134 = vmatprep.mubr.f32.mxu0 0.0
  %135 = vmatmul.mubr.f32.gmra.mrb[0].mxu0 %v20
  %v136 = vpop.f32.mrb[0].mxu0
  %v137 = vadd.f32 0.0, %v136
  %v138 = vpop.f32.mrb[0].mxu0
  %v139 = vadd.f32 0.0, %v138
  %140 = vmatprep.mubr.f32.mxu0 0.0
  %141 = vmatmul.mubr.f32.gmra.mrb[0].mxu0 %v21
  %v142 = vpop.f32.mrb[0].mxu0
  %v143 = vadd.f32 0.0, %v142
  %v144 = vpop.f32.mrb[0].mxu0
  %v145 = vadd.f32 0.0, %v144
  %146 = vdwg.mxu0
  %147 = vmatprep.subr.mxu0 0.0
  %148 = vmatpush1.msra.mxu0 %v24
  %149 = vmatprep.subr.mxu0 0.0
  %150 = vmatpush1.msra.mxu0 %v27
  %151 = vmatprep.subr.mxu0 0.0
  %152 = vmatpush1.msra.mxu0 %v30
  %153 = vmatprep.subr.mxu0 0.0
  %154 = vmatpush1.msra.mxu0 %v33
  %155 = vmatprep.subr.mxu0 0.0
  %156 = vmatpush1.msra.mxu0 %v36
  %157 = vmatprep.subr.mxu0 0.0
  %158 = vmatpush1.msra.mxu0 %v39
  %159 = vmatprep.subr.mxu0 0.0
  %160 = vmatpush1.msra.mxu0 %v42
  %161 = vmatprep.subr.mxu0 0.0
  %162 = vmatpush1.msra.mxu0 %v45
  %163 = vmatprep.subr.mxu0 0.0
  %164 = vmatpush1.msra.mxu0 %v48
  %165 = vmatprep.subr.mxu0 0.0
  %166 = vmatpush1.msra.mxu0 %v51
  %167 = vmatprep.subr.mxu0 0.0
  %168 = vmatpush1.msra.mxu0 %v54
  %169 = vmatprep.subr.mxu0 0.0
  %170 = vmatpush1.msra.mxu0 %v57
  %171 = vmatprep.subr.mxu0 0.0
  %172 = vmatpush1.msra.mxu0 %v60
  %173 = vmatprep.subr.mxu0 0.0
  %174 = vmatpush1.msra.mxu0 %v63
  %175 = vmatprep.subr.mxu0 0.0
  %176 = vmatpush1.msra.mxu0 %v66
  %177 = vmatprep.subr.mxu0 0.0
  %178 = vmatpush1.msra.mxu0 %v69
  %179 = vmatprep.subr.mxu0 0.0
  %180 = vmatpush1.msra.mxu0 0.0
  %181 = vmatprep.subr.mxu0 0.0
  %182 = vmatpush1.msra.mxu0 0.0
  %183 = vmatprep.subr.mxu0 0.0
  %184 = vmatpush1.msra.mxu0 0.0
  %185 = vmatprep.subr.mxu0 0.0
  %186 = vmatpush1.msra.mxu0 0.0
  %187 = vmatprep.subr.mxu0 0.0
  %188 = vmatpush1.msra.mxu0 0.0
  %189 = vmatprep.subr.mxu0 0.0
  %190 = vmatpush1.msra.mxu0 0.0
  %191 = vmatprep.subr.mxu0 0.0
  %192 = vmatpush1.msra.mxu0 0.0
  %193 = vmatprep.subr.mxu0 0.0
  %194 = vmatpush1.msra.mxu0 0.0
  %195 = vmatprep.subr.mxu0 0.0
  %196 = vmatpush1.msra.mxu0 0.0
  %197 = vmatprep.subr.mxu0 0.0
  %198 = vmatpush1.msra.mxu0 0.0
  %199 = vmatprep.subr.mxu0 0.0
  %200 = vmatpush1.msra.mxu0 0.0
  %201 = vmatprep.subr.mxu0 0.0
  %202 = vmatpush1.msra.mxu0 0.0
  %203 = vmatprep.subr.mxu0 0.0
  %204 = vmatpush1.msra.mxu0 0.0
  %205 = vmatprep.subr.mxu0 0.0
  %206 = vmatpush1.msra.mxu0 0.0
  %207 = vmatprep.subr.mxu0 0.0
  %208 = vmatpush1.msra.mxu0 0.0
  %209 = vmatprep.subr.mxu0 0.0
  %210 = vmatpush1.msra.mxu0 0.0
  %211 = vmatprep.mubr.f32.mxu0 0.0
  %212 = vmatmul.mubr.f32.gmra.mrb[0].mxu0 %v20
  %v213 = vpop.f32.mrb[0].mxu0
  %v214 = vadd.f32 0.0, %v213
  %v215 = vpop.f32.mrb[0].mxu0
  %216 = vmatprep.mubr.f32.mxu0 0.0
  %217 = vmatmul.mubr.f32.gmra.mrb[0].mxu0 %v21
  %v218 = vpop.f32.mrb[0].mxu0
  %v219 = vadd.f32 0.0, %v218
  %v220 = vpop.f32.mrb[0].mxu0
  %221 = vdwg.mxu0
  %v222 = vld [vmem:[%s2] sm:$0xff]
  %v223 = vld [vmem:[%s2 + $0x8] sm:$0xff]
  %v224 = vld [vmem:[%s2 + $0x10] sm:$0xff]
  %v225 = vld [vmem:[%s2 + $0x18] sm:$0xff]
  %v226 = vld [vmem:[%s2 + $0x20] sm:$0xff]
  %v227 = vld [vmem:[%s2 + $0x28] sm:$0xff]
  %v228 = vld [vmem:[%s2 + $0x30] sm:$0xff]
  %v229 = vld [vmem:[%s2 + $0x38] sm:$0xff]
  %v230 = vld [vmem:[%s2 + $0x40] sm:$0xff]
  %v231 = vld [vmem:[%s2 + $0x48] sm:$0xff]
  %v232 = vld [vmem:[%s2 + $0x50] sm:$0xff]
  %v233 = vld [vmem:[%s2 + $0x58] sm:$0xff]
  %v234 = vld [vmem:[%s2 + $0x60] sm:$0xff]
  %v235 = vld [vmem:[%s2 + $0x68] sm:$0xff]
  %v236 = vld [vmem:[%s2 + $0x70] sm:$0xff]
  %v237 = vld [vmem:[%s2 + $0x78] sm:$0xff]
  %v238 = vld [vmem:[%s2 + $0x80] sm:$0xff]
  %v239 = vld [vmem:[%s2 + $0x88] sm:$0xff]
  %v240 = vld [vmem:[%s2 + $0x90] sm:$0xff]
  %v241 = vld [vmem:[%s2 + $0x98] sm:$0xff]
  %v242 = vld [vmem:[%s2 + $0xa0] sm:$0xff]
  %v243 = vld [vmem:[%s2 + $0xa8] sm:$0xff]
  %v244 = vld [vmem:[%s2 + $0xb0] sm:$0xff]
  %v245 = vld [vmem:[%s2 + $0xb8] sm:$0xff]
  %v246 = vld [vmem:[%s2 + $0xc0] sm:$0xff]
  %v247 = vld [vmem:[%s2 + $0xc8] sm:$0xff]
  %v248 = vld [vmem:[%s2 + $0xd0] sm:$0xff]
  %v249 = vld [vmem:[%s2 + $0xd8] sm:$0xff]
  %v250 = vld [vmem:[%s2 + $0xe0] sm:$0xff]
  %v251 = vld [vmem:[%s2 + $0xe8] sm:$0xff]
  %v252 = vld [vmem:[%s2 + $0xf0] sm:$0xff]
  %v253 = vld [vmem:[%s2 + $0xf8] sm:$0xff]
  %v254 = vld [vmem:[%s2 + $0x100] sm:$0xff]
  %v255 = vld [vmem:[%s2 + $0x108] sm:$0xff]
  %v256 = vld [vmem:[%s2 + $0x110] sm:$0xff]
  %v257 = vld [vmem:[%s2 + $0x118] sm:$0xff]
  %v258 = vld [vmem:[%s2 + $0x120] sm:$0xff]
  %v259 = vld [vmem:[%s2 + $0x128] sm:$0xff]
  %v260 = vld [vmem:[%s2 + $0x130] sm:$0xff]
  %v261 = vld [vmem:[%s2 + $0x138] sm:$0xff]
  %v262 = vld [vmem:[%s2 + $0x140] sm:$0xff]
  %v263 = vld [vmem:[%s2 + $0x148] sm:$0xff]
  %v264 = vld [vmem:[%s2 + $0x150] sm:$0xff]
  %v265 = vld [vmem:[%s2 + $0x158] sm:$0xff]
  %v266 = vld [vmem:[%s2 + $0x160] sm:$0xff]
  %v267 = vld [vmem:[%s2 + $0x168] sm:$0xff]
  %v268 = vld [vmem:[%s2 + $0x170] sm:$0xff]
  %v269 = vld [vmem:[%s2 + $0x178] sm:$0xff]
  %270 = vmatprep.subr.mxu0 0.0
  %271 = vmatpush1.msra.mxu0 %v222
  %272 = vmatprep.subr.mxu0 0.0
  %273 = vmatpush1.msra.mxu0 %v223
  %274 = vmatprep.subr.mxu0 0.0
  %275 = vmatpush1.msra.mxu0 %v224
  %276 = vmatprep.subr.mxu0 0.0
  %277 = vmatpush1.msra.mxu0 %v225
  %278 = vmatprep.subr.mxu0 0.0
  %279 = vmatpush1.msra.mxu0 %v226
  %280 = vmatprep.subr.mxu0 0.0
  %281 = vmatpush1.msra.mxu0 %v227
  %282 = vmatprep.subr.mxu0 0.0
  %283 = vmatpush1.msra.mxu0 %v228
  %284 = vmatprep.subr.mxu0 0.0
  %285 = vmatpush1.msra.mxu0 %v229
  %286 = vmatprep.subr.mxu0 0.0
  %287 = vmatpush1.msra.mxu0 %v230
  %288 = vmatprep.subr.mxu0 0.0
  %289 = vmatpush1.msra.mxu0 %v231
  %290 = vmatprep.subr.mxu0 0.0
  %291 = vmatpush1.msra.mxu0 %v232
  %292 = vmatprep.subr.mxu0 0.0
  %293 = vmatpush1.msra.mxu0 %v233
  %294 = vmatprep.subr.mxu0 0.0
  %295 = vmatpush1.msra.mxu0 %v234
  %296 = vmatprep.subr.mxu0 0.0
  %297 = vmatpush1.msra.mxu0 %v235
  %298 = vmatprep.subr.mxu0 0.0
  %299 = vmatpush1.msra.mxu0 %v236
  %300 = vmatprep.subr.mxu0 0.0
  %301 = vmatpush1.msra.mxu0 %v237
  %302 = vmatprep.subr.mxu0 0.0
  %303 = vmatpush1.msra.mxu0 %v238
  %304 = vmatprep.subr.mxu0 0.0
  %305 = vmatpush1.msra.mxu0 %v239
  %306 = vmatprep.subr.mxu0 0.0
  %307 = vmatpush1.msra.mxu0 %v240
  %308 = vmatprep.subr.mxu0 0.0
  %309 = vmatpush1.msra.mxu0 %v241
  %310 = vmatprep.subr.mxu0 0.0
  %311 = vmatpush1.msra.mxu0 %v242
  %312 = vmatprep.subr.mxu0 0.0
  %313 = vmatpush1.msra.mxu0 %v243
  %314 = vmatprep.subr.mxu0 0.0
  %315 = vmatpush1.msra.mxu0 %v244
  %316 = vmatprep.subr.mxu0 0.0
  %317 = vmatpush1.msra.mxu0 %v245
  %318 = vmatprep.subr.mxu0 0.0
  %319 = vmatpush1.msra.mxu0 %v246
  %320 = vmatprep.subr.mxu0 0.0
  %321 = vmatpush1.msra.mxu0 %v247
  %322 = vmatprep.subr.mxu0 0.0
  %323 = vmatpush1.msra.mxu0 %v248
  %324 = vmatprep.subr.mxu0 0.0
  %325 = vmatpush1.msra.mxu0 %v249
  %326 = vmatprep.subr.mxu0 0.0
  %327 = vmatpush1.msra.mxu0 %v250
  %328 = vmatprep.subr.mxu0 0.0
  %329 = vmatpush1.msra.mxu0 %v251
  %330 = vmatprep.subr.mxu0 0.0
  %331 = vmatpush1.msra.mxu0 %v252
  %332 = vmatprep.subr.mxu0 0.0
  %333 = vmatpush1.msra.mxu0 %v253
  %334 = vmatprep.mubr.f32.mxu0 %v139
  %335 = vmatmul.mubr.f32.gmra.mrb[0].mxu0 %v137
  %v336 = vpop.f32.mrb[0].mxu0
  %v337 = vadd.f32 0.0, %v336
  %v338 = vpop.f32.mrb[0].mxu0
  %339 = vmatprep.mubr.f32.mxu0 %v145
  %340 = vmatmul.mubr.f32.gmra.mrb[0].mxu0 %v143
  %v341 = vpop.f32.mrb[0].mxu0
  %v342 = vadd.f32 0.0, %v341
  %v343 = vpop.f32.mrb[0].mxu0
  %344 = vdwg.mxu0
  %345 = vmatprep.subr.mxu0 0.0
  %346 = vmatpush1.msra.mxu0 %v254
  %347 = vmatprep.subr.mxu0 0.0
  %348 = vmatpush1.msra.mxu0 %v255
  %349 = vmatprep.subr.mxu0 0.0
  %350 = vmatpush1.msra.mxu0 %v256
  %351 = vmatprep.subr.mxu0 0.0
  %352 = vmatpush1.msra.mxu0 %v257
  %353 = vmatprep.subr.mxu0 0.0
  %354 = vmatpush1.msra.mxu0 %v258
  %355 = vmatprep.subr.mxu0 0.0
  %356 = vmatpush1.msra.mxu0 %v259
  %357 = vmatprep.subr.mxu0 0.0
  %358 = vmatpush1.msra.mxu0 %v260
  %359 = vmatprep.subr.mxu0 0.0
  %360 = vmatpush1.msra.mxu0 %v261
  %361 = vmatprep.subr.mxu0 0.0
  %362 = vmatpush1.msra.mxu0 %v262
  %363 = vmatprep.subr.mxu0 0.0
  %364 = vmatpush1.msra.mxu0 %v263
  %365 = vmatprep.subr.mxu0 0.0
  %366 = vmatpush1.msra.mxu0 %v264
  %367 = vmatprep.subr.mxu0 0.0
  %368 = vmatpush1.msra.mxu0 %v265
  %369 = vmatprep.subr.mxu0 0.0
  %370 = vmatpush1.msra.mxu0 %v266
  %371 = vmatprep.subr.mxu0 0.0
  %372 = vmatpush1.msra.mxu0 %v267
  %373 = vmatprep.subr.mxu0 0.0
  %374 = vmatpush1.msra.mxu0 %v268
  %375 = vmatprep.subr.mxu0 0.0
  %376 = vmatpush1.msra.mxu0 %v269
  %377 = vmatprep.subr.mxu0 0.0
  %378 = vmatpush1.msra.mxu0 0.0
  %379 = vmatprep.subr.mxu0 0.0
  %380 = vmatpush1.msra.mxu0 0.0
  %381 = vmatprep.subr.mxu0 0.0
  %382 = vmatpush1.msra.mxu0 0.0
  %383 = vmatprep.subr.mxu0 0.0
  %384 = vmatpush1.msra.mxu0 0.0
  %385 = vmatprep.subr.mxu0 0.0
  %386 = vmatpush1.msra.mxu0 0.0
  %387 = vmatprep.subr.mxu0 0.0
  %388 = vmatpush1.msra.mxu0 0.0
  %389 = vmatprep.subr.mxu0 0.0
  %390 = vmatpush1.msra.mxu0 0.0
  %391 = vmatprep.subr.mxu0 0.0
  %392 = vmatpush1.msra.mxu0 0.0
  %393 = vmatprep.subr.mxu0 0.0
  %394 = vmatpush1.msra.mxu0 0.0
  %395 = vmatprep.subr.mxu0 0.0
  %396 = vmatpush1.msra.mxu0 0.0
  %397 = vmatprep.subr.mxu0 0.0
  %398 = vmatpush1.msra.mxu0 0.0
  %399 = vmatprep.subr.mxu0 0.0
  %400 = vmatpush1.msra.mxu0 0.0
  %401 = vmatprep.subr.mxu0 0.0
  %402 = vmatpush1.msra.mxu0 0.0
  %403 = vmatprep.subr.mxu0 0.0
  %404 = vmatpush1.msra.mxu0 0.0
  %405 = vmatprep.subr.mxu0 0.0
  %406 = vmatpush1.msra.mxu0 0.0
  %407 = vmatprep.subr.mxu0 0.0
  %408 = vmatpush1.msra.mxu0 0.0
  %409 = vmatprep.mubr.f32.mxu0 0.0
  %410 = vmatmul.mubr.f32.gmra.mrb[0].mxu0 %v214
  %v411 = vpop.f32.mrb[0].mxu0
  %v412 = vadd.f32 %v337, %v411
  %v413 = vpop.f32.mrb[0].mxu0
  %414 = vmatprep.mubr.f32.mxu0 0.0
  %415 = vmatmul.mubr.f32.gmra.mrb[0].mxu0 %v219
  %v416 = vpop.f32.mrb[0].mxu0
  %v417 = vadd.f32 %v342, %v416
  %v418 = vpop.f32.mrb[0].mxu0
  %419 = vdwg.mxu0
  %420 = vmax.xlane.f32.xlu0 %v412
  %v421 = vpop.xlane.xlu0 %420
  %422 = vmax.xlane.f32.xlu0 %v417
  %v423 = vpop.xlane.xlu0 %422
  %v424 = vsub.f32 %v412, %v421
  %v425 = vsub.f32 %v417, %v423
  %v426 = vmul.f32 %v424, 1.442695
  %v427 = vpow.pop %v426
  %v428 = vmul.f32 %v425, 1.442695
  %v429 = vpow.pop %v428
  %v430 = vld [vmem:[%s3] sm:$0xff]
  %v431 = vld [vmem:[%s3 + $0x8] sm:$0xff]
  %v432 = vld [vmem:[%s3 + $0x10] sm:$0xff]
  %v433 = vld [vmem:[%s3 + $0x18] sm:$0xff]
  %v434 = vld [vmem:[%s3 + $0x20] sm:$0xff]
  %v435 = vld [vmem:[%s3 + $0x28] sm:$0xff]
  %v436 = vld [vmem:[%s3 + $0x30] sm:$0xff]
  %v437 = vld [vmem:[%s3 + $0x38] sm:$0xff]
  %v438 = vld [vmem:[%s3 + $0x40] sm:$0xff]
  %v439 = vld [vmem:[%s3 + $0x48] sm:$0xff]
  %v440 = vld [vmem:[%s3 + $0x50] sm:$0xff]
  %v441 = vld [vmem:[%s3 + $0x58] sm:$0xff]
  %v442 = vld [vmem:[%s3 + $0x60] sm:$0xff]
  %v443 = vld [vmem:[%s3 + $0x68] sm:$0xff]
  %v444 = vld [vmem:[%s3 + $0x70] sm:$0xff]
  %v445 = vld [vmem:[%s3 + $0x78] sm:$0xff]
  %446 = vmatprep.subr.mxu0 0.0
  %447 = vmatpush1.msra.mxu0 %v430
  %448 = vmatprep.subr.mxu0 0.0
  %449 = vmatpush1.msra.mxu0 %v431
  %450 = vmatprep.subr.mxu0 0.0
  %451 = vmatpush1.msra.mxu0 %v432
  %452 = vmatprep.subr.mxu0 0.0
  %453 = vmatpush1.msra.mxu0 %v433
  %454 = vmatprep.subr.mxu0 0.0
  %455 = vmatpush1.msra.mxu0 %v434
  %456 = vmatprep.subr.mxu0 0.0
  %457 = vmatpush1.msra.mxu0 %v435
  %458 = vmatprep.subr.mxu0 0.0
  %459 = vmatpush1.msra.mxu0 %v436
  %460 = vmatprep.subr.mxu0 0.0
  %461 = vmatpush1.msra.mxu0 %v437
  %462 = vmatprep.subr.mxu0 0.0
  %463 = vmatpush1.msra.mxu0 %v438
  %464 = vmatprep.subr.mxu0 0.0
  %465 = vmatpush1.msra.mxu0 %v439
  %466 = vmatprep.subr.mxu0 0.0
  %467 = vmatpush1.msra.mxu0 %v440
  %468 = vmatprep.subr.mxu0 0.0
  %469 = vmatpush1.msra.mxu0 %v441
  %470 = vmatprep.subr.mxu0 0.0
  %471 = vmatpush1.msra.mxu0 %v442
  %472 = vmatprep.subr.mxu0 0.0
  %473 = vmatpush1.msra.mxu0 %v443
  %474 = vmatprep.subr.mxu0 0.0
  %475 = vmatpush1.msra.mxu0 %v444
  %476 = vmatprep.subr.mxu0 0.0
  %477 = vmatpush1.msra.mxu0 %v445
  %478 = vmatprep.subr.mxu0 0.0
  %479 = vmatpush1.msra.mxu0 0.0
  %480 = vmatprep.subr.mxu0 0.0
  %481 = vmatpush1.msra.mxu0 0.0
  %482 = vmatprep.subr.mxu0 0.0
  %483 = vmatpush1.msra.mxu0 0.0
  %484 = vmatprep.subr.mxu0 0.0
  %485 = vmatpush1.msra.mxu0 0.0
  %486 = vmatprep.subr.mxu0 0.0
  %487 = vmatpush1.msra.mxu0 0.0
  %488 = vmatprep.subr.mxu0 0.0
  %489 = vmatpush1.msra.mxu0 0.0
  %490 = vmatprep.subr.mxu0 0.0
  %491 = vmatpush1.msra.mxu0 0.0
  %492 = vmatprep.subr.mxu0 0.0
  %493 = vmatpush1.msra.mxu0 0.0
  %494 = vmatprep.subr.mxu0 0.0
  %495 = vmatpush1.msra.mxu0 0.0
  %496 = vmatprep.subr.mxu0 0.0
  %497 = vmatpush1.msra.mxu0 0.0
  %498 = vmatprep.subr.mxu0 0.0
  %499 = vmatpush1.msra.mxu0 0.0
  %500 = vmatprep.subr.mxu0 0.0
  %501 = vmatpush1.msra.mxu0 0.0
  %502 = vmatprep.subr.mxu0 0.0
  %503 = vmatpush1.msra.mxu0 0.0
  %504 = vmatprep.subr.mxu0 0.0
  %505 = vmatpush1.msra.mxu0 0.0
  %506 = vmatprep.subr.mxu0 0.0
  %507 = vmatpush1.msra.mxu0 0.0
  %508 = vmatprep.subr.mxu0 0.0
  %509 = vmatpush1.msra.mxu0 0.0
  %510 = vmatprep.mubr.f32.mxu0 0.0
  %511 = vmatmul.mubr.f32.gmra.mrb[0].mxu0 %v427
  %v512 = vpop.f32.mrb[0].mxu0
  %v513 = vadd.f32 0.0, %v512
  %v514 = vpop.f32.mrb[0].mxu0
  %515 = vmatprep.mubr.f32.mxu0 0.0
  %516 = vmatmul.mubr.f32.gmra.mrb[0].mxu0 %v429
  %v517 = vpop.f32.mrb[0].mxu0
  %v518 = vadd.f32 0.0, %v517
  %v519 = vpop.f32.mrb[0].mxu0
  %520 = vdwg.mxu0
  %v521 = vrcp.pop %v513
  %v522 = vrcp.pop %v518
  %v523 = vmul.f32 %v427, %v521
  %v524 = vmul.f32 %v429, %v522
  %v525 = vld [vmem:[%s4] sm:$0xff]
  %v526 = vld [vmem:[%s4 + $0x8] sm:$0xff]
  %v527 = vld [vmem:[%s4 + $0x10] sm:$0xff]
  %v528 = vld [vmem:[%s4 + $0x18] sm:$0xff]
  %v529 = vld [vmem:[%s4 + $0x20] sm:$0xff]
  %v530 = vld [vmem:[%s4 + $0x28] sm:$0xff]
  %v531 = vld [vmem:[%s4 + $0x30] sm:$0xff]
  %v532 = vld [vmem:[%s4 + $0x38] sm:$0xff]
  %v533 = vld [vmem:[%s4 + $0x40] sm:$0xff]
  %v534 = vld [vmem:[%s4 + $0x48] sm:$0xff]
  %v535 = vld [vmem:[%s4 + $0x50] sm:$0xff]
  %v536 = vld [vmem:[%s4 + $0x58] sm:$0xff]
  %v537 = vld [vmem:[%s4 + $0x60] sm:$0xff]
  %v538 = vld [vmem:[%s4 + $0x68] sm:$0xff]
  %v539 = vld [vmem:[%s4 + $0x70] sm:$0xff]
  %v540 = vld [vmem:[%s4 + $0x78] sm:$0xff]
  %v541 = vld [vmem:[%s4 + $0x80] sm:$0xff]
  %v542 = vld [vmem:[%s4 + $0x88] sm:$0xff]
  %v543 = vld [vmem:[%s4 + $0x90] sm:$0xff]
  %v544 = vld [vmem:[%s4 + $0x98] sm:$0xff]
  %v545 = vld [vmem:[%s4 + $0xa0] sm:$0xff]
  %v546 = vld [vmem:[%s4 + $0xa8] sm:$0xff]
  %v547 = vld [vmem:[%s4 + $0xb0] sm:$0xff]
  %v548 = vld [vmem:[%s4 + $0xb8] sm:$0xff]
  %v549 = vld [vmem:[%s4 + $0xc0] sm:$0xff]
  %v550 = vld [vmem:[%s4 + $0xc8] sm:$0xff]
  %v551 = vld [vmem:[%s4 + $0xd0] sm:$0xff]
  %v552 = vld [vmem:[%s4 + $0xd8] sm:$0xff]
  %v553 = vld [vmem:[%s4 + $0xe0] sm:$0xff]
  %v554 = vld [vmem:[%s4 + $0xe8] sm:$0xff]
  %v555 = vld [vmem:[%s4 + $0xf0] sm:$0xff]
  %v556 = vld [vmem:[%s4 + $0xf8] sm:$0xff]
  %v557 = vld [vmem:[%s4 + $0x100] sm:$0xff]
  %v558 = vld [vmem:[%s4 + $0x108] sm:$0xff]
  %v559 = vld [vmem:[%s4 + $0x110] sm:$0xff]
  %v560 = vld [vmem:[%s4 + $0x118] sm:$0xff]
  %v561 = vld [vmem:[%s4 + $0x120] sm:$0xff]
  %v562 = vld [vmem:[%s4 + $0x128] sm:$0xff]
  %v563 = vld [vmem:[%s4 + $0x130] sm:$0xff]
  %v564 = vld [vmem:[%s4 + $0x138] sm:$0xff]
  %v565 = vld [vmem:[%s4 + $0x140] sm:$0xff]
  %v566 = vld [vmem:[%s4 + $0x148] sm:$0xff]
  %v567 = vld [vmem:[%s4 + $0x150] sm:$0xff]
  %v568 = vld [vmem:[%s4 + $0x158] sm:$0xff]
  %v569 = vld [vmem:[%s4 + $0x160] sm:$0xff]
  %v570 = vld [vmem:[%s4 + $0x168] sm:$0xff]
  %v571 = vld [vmem:[%s4 + $0x170] sm:$0xff]
  %v572 = vld [vmem:[%s4 + $0x178] sm:$0xff]
  %573 = vmatprep.subr.mxu0 %v526
  %574 = vmatpush1.msra.mxu0 %v525
  %575 = vmatprep.subr.mxu0 %v529
  %576 = vmatpush1.msra.mxu0 %v528
  %577 = vmatprep.subr.mxu0 %v532
  %578 = vmatpush1.msra.mxu0 %v531
  %579 = vmatprep.subr.mxu0 %v535
  %580 = vmatpush1.msra.mxu0 %v534
  %581 = vmatprep.subr.mxu0 %v538
  %582 = vmatpush1.msra.mxu0 %v537
  %583 = vmatprep.subr.mxu0 %v541
  %584 = vmatpush1.msra.mxu0 %v540
  %585 = vmatprep.subr.mxu0 %v544
  %586 = vmatpush1.msra.mxu0 %v543
  %587 = vmatprep.subr.mxu0 %v547
  %588 = vmatpush1.msra.mxu0 %v546
  %589 = vmatprep.subr.mxu0 %v550
  %590 = vmatpush1.msra.mxu0 %v549
  %591 = vmatprep.subr.mxu0 %v553
  %592 = vmatpush1.msra.mxu0 %v552
  %593 = vmatprep.subr.mxu0 %v556
  %594 = vmatpush1.msra.mxu0 %v555
  %595 = vmatprep.subr.mxu0 %v559
  %596 = vmatpush1.msra.mxu0 %v558
  %597 = vmatprep.subr.mxu0 %v562
  %598 = vmatpush1.msra.mxu0 %v561
  %599 = vmatprep.subr.mxu0 %v565
  %600 = vmatpush1.msra.mxu0 %v564
  %601 = vmatprep.subr.mxu0 %v568
  %602 = vmatpush1.msra.mxu0 %v567
  %603 = vmatprep.subr.mxu0 %v571
  %604 = vmatpush1.msra.mxu0 %v570
  %605 = vmatprep.subr.mxu0 0.0
  %606 = vmatpush1.msra.mxu0 0.0
  %607 = vmatprep.subr.mxu0 0.0
  %608 = vmatpush1.msra.mxu0 0.0
  %609 = vmatprep.subr.mxu0 0.0
  %610 = vmatpush1.msra.mxu0 0.0
  %611 = vmatprep.subr.mxu0 0.0
  %612 = vmatpush1.msra.mxu0 0.0
  %613 = vmatprep.subr.mxu0 0.0
  %614 = vmatpush1.msra.mxu0 0.0
  %615 = vmatprep.subr.mxu0 0.0
  %616 = vmatpush1.msra.mxu0 0.0
  %617 = vmatprep.subr.mxu0 0.0
  %618 = vmatpush1.msra.mxu0 0.0
  %619 = vmatprep.subr.mxu0 0.0
  %620 = vmatpush1.msra.mxu0 0.0
  %621 = vmatprep.subr.mxu0 0.0
  %622 = vmatpush1.msra.mxu0 0.0
  %623 = vmatprep.subr.mxu0 0.0
  %624 = vmatpush1.msra.mxu0 0.0
  %625 = vmatprep.subr.mxu0 0.0
  %626 = vmatpush1.msra.mxu0 0.0
  %627 = vmatprep.subr.mxu0 0.0
  %628 = vmatpush1.msra.mxu0 0.0
  %629 = vmatprep.subr.mxu0 0.0
  %630 = vmatpush1.msra.mxu0 0.0
  %631 = vmatprep.subr.mxu0 0.0
  %632 = vmatpush1.msra.mxu0 0.0
  %633 = vmatprep.subr.mxu0 0.0
  %634 = vmatpush1.msra.mxu0 0.0
  %635 = vmatprep.subr.mxu0 0.0
  %636 = vmatpush1.msra.mxu0 0.0
  %637 = vmatprep.mubr.f32.mxu0 0.0
  %638 = vmatmul.mubr.f32.gmra.mrb[0].mxu0 %v523
  %v639 = vpop.f32.mrb[0].mxu0
  %v640 = vadd.f32 0.0, %v639
  %v641 = vpop.f32.mrb[0].mxu0
  %v642 = vadd.f32 0.0, %v641
  %643 = vmatprep.mubr.f32.mxu0 0.0
  %644 = vmatmul.mubr.f32.gmra.mrb[0].mxu0 %v524
  %v645 = vpop.f32.mrb[0].mxu0
  %v646 = vadd.f32 0.0, %v645
  %v647 = vpop.f32.mrb[0].mxu0
  %v648 = vadd.f32 0.0, %v647
  %649 = vdwg.mxu0
  %650 = vmatprep.subr.mxu0 0.0
  %651 = vmatpush1.msra.mxu0 %v527
  %652 = vmatprep.subr.mxu0 0.0
  %653 = vmatpush1.msra.mxu0 %v530
  %654 = vmatprep.subr.mxu0 0.0
  %655 = vmatpush1.msra.mxu0 %v533
  %656 = vmatprep.subr.mxu0 0.0
  %657 = vmatpush1.msra.mxu0 %v536
  %658 = vmatprep.subr.mxu0 0.0
  %659 = vmatpush1.msra.mxu0 %v539
  %660 = vmatprep.subr.mxu0 0.0
  %661 = vmatpush1.msra.mxu0 %v542
  %662 = vmatprep.subr.mxu0 0.0
  %663 = vmatpush1.msra.mxu0 %v545
  %664 = vmatprep.subr.mxu0 0.0
  %665 = vmatpush1.msra.mxu0 %v548
  %666 = vmatprep.subr.mxu0 0.0
  %667 = vmatpush1.msra.mxu0 %v551
  %668 = vmatprep.subr.mxu0 0.0
  %669 = vmatpush1.msra.mxu0 %v554
  %670 = vmatprep.subr.mxu0 0.0
  %671 = vmatpush1.msra.mxu0 %v557
  %672 = vmatprep.subr.mxu0 0.0
  %673 = vmatpush1.msra.mxu0 %v560
  %674 = vmatprep.subr.mxu0 0.0
  %675 = vmatpush1.msra.mxu0 %v563
  %676 = vmatprep.subr.mxu0 0.0
  %677 = vmatpush1.msra.mxu0 %v566
  %678 = vmatprep.subr.mxu0 0.0
  %679 = vmatpush1.msra.mxu0 %v569
  %680 = vmatprep.subr.mxu0 0.0
  %681 = vmatpush1.msra.mxu0 %v572
  %682 = vmatprep.subr.mxu0 0.0
  %683 = vmatpush1.msra.mxu0 0.0
  %684 = vmatprep.subr.mxu0 0.0
  %685 = vmatpush1.msra.mxu0 0.0
  %686 = vmatprep.subr.mxu0 0.0
  %687 = vmatpush1.msra.mxu0 0.0
  %688 = vmatprep.subr.mxu0 0.0
  %689 = vmatpush1.msra.mxu0 0.0
  %690 = vmatprep.subr.mxu0 0.0
  %691 = vmatpush1.msra.mxu0 0.0
  %692 = vmatprep.subr.mxu0 0.0
  %693 = vmatpush1.msra.mxu0 0.0
  %694 = vmatprep.subr.mxu0 0.0
  %695 = vmatpush1.msra.mxu0 0.0
  %696 = vmatprep.subr.mxu0 0.0
  %697 = vmatpush1.msra.mxu0 0.0
  %698 = vmatprep.subr.mxu0 0.0
  %699 = vmatpush1.msra.mxu0 0.0
  %700 = vmatprep.subr.mxu0 0.0
  %701 = vmatpush1.msra.mxu0 0.0
  %702 = vmatprep.subr.mxu0 0.0
  %703 = vmatpush1.msra.mxu0 0.0
  %704 = vmatprep.subr.mxu0 0.0
  %705 = vmatpush1.msra.mxu0 0.0
  %706 = vmatprep.subr.mxu0 0.0
  %707 = vmatpush1.msra.mxu0 0.0
  %708 = vmatprep.subr.mxu0 0.0
  %709 = vmatpush1.msra.mxu0 0.0
  %710 = vmatprep.subr.mxu0 0.0
  %711 = vmatpush1.msra.mxu0 0.0
  %712 = vmatprep.subr.mxu0 0.0
  %713 = vmatpush1.msra.mxu0 0.0
  %714 = vmatprep.mubr.f32.mxu0 0.0
  %715 = vmatmul.mubr.f32.gmra.mrb[0].mxu0 %v523
  %v716 = vpop.f32.mrb[0].mxu0
  %v717 = vadd.f32 0.0, %v716
  %v718 = vpop.f32.mrb[0].mxu0
  %719 = vmatprep.mubr.f32.mxu0 0.0
  %720 = vmatmul.mubr.f32.gmra.mrb[0].mxu0 %v524
  %v721 = vpop.f32.mrb[0].mxu0
  %v722 = vadd.f32 0.0, %v721
  %v723 = vpop.f32.mrb[0].mxu0
  %724 = vdwg.mxu0
  %725 = vst [vmem:[%s5] sm:$0xff] %v640
  %726 = vst [vmem:[%s5 + $0x8] sm:$0xff] %v642
  %727 = vst [vmem:[%s5 + $0x10] sm:$0xff] %v717
  %728 = vst [vmem:[%s5 + $0x18] sm:$0xff] %v646
  %729 = vst [vmem:[%s5 + $0x20] sm:$0xff] %v648
  %730 = vst [vmem:[%s5 + $0x28] sm:$0xff] %v722
  // Predicated region
  $region22: #{gst_forward.1} parent=0 // pred_check
    _
  $region23: #{gst_forward.1} parent=0 // pred_check_branch
    %732 = sbr.rel (0) target = $region25
  $region24: #{gst_forward.1} parent=0 // pred_region
    _
  $region25: #{gst_forward.1} parent=0 // pred_fallthru
    _
  // Predicated region
  $region26: #{gst_forward.1} parent=0 // pred_check
    _
  $region27: #{gst_forward.1} parent=0 // pred_check_branch
    %734 = sbr.rel (0) target = $region29
  $region28: #{gst_forward.1} parent=0 // pred_region
    _
  $region29: #{gst_forward.1} parent=0 // pred_fallthru
    _

</llo_original>
